<compile_context>
chip_gen: v7x
topology: tpu7x:2x2x1
jax: 0.10.0
libtpu: 0.0.40
codegen_flags: <defaults>
</compile_context>

<pallas_src>
import jax
import jax.numpy as jnp
from jax.experimental import pallas as pl
from jax.experimental.pallas import tpu as pltpu


_NEG_LARGE = -1e30  # bias of padded feature columns -> exp underflows to exactly 0


def _round_up(a, m):
    return ((a + m - 1) // m) * m


def _next_pow2(n):
    p = 1
    while p < n:
        p *= 2
    return p


def _default_lane_width():
    """256-lane packing for v6e/v7x-class MXUs (2x256^2), 128 for v5e and older."""
    try:
        kind = jax.devices()[0].device_kind.lower()
    except Exception:
        return 128
    if any(tag in kind for tag in ("v2", "v3", "v4", "v5")):
        return 128
    return 256


def _choose_ppb(packs_needed, seq_len, *, target_rows=512, max_ppb=64):
    """Packs (of P lane-packed instances) per grid step.

    Multiple of 8 (sublane-aligned output block / sel matmul), R = PPB*S near
    target_rows, capped at max_ppb (the (PPB, PPB*S) selection matrix is quadratic in
    PPB), and >= 2 grid steps whenever there is more than one minimal block of work so
    v7x's two TensorCores both get a share.
    """
    cap = max(8, min(max_ppb, _round_up(max(target_rows // max(seq_len, 1), 1), 8)))
    need = _round_up(max(packs_needed, 1), 8)
    if need <= 8:
        return 8
    if need <= cap:
        # Fits in one block, but prefer two grid steps (megacore on v7x).
        return max(8, _round_up(-(-packs_needed // 2), 8))
    return cap


def _self_attention_kernel(x_ref, wbd_ref, b_ref, gsum_ref, sel_ref, o_ref):
    """Fused scorer-linear + per-instance feature-softmax + sequence-sum.

    x_ref:    (1, R, PD)   R = PPB*S rows; P instances packed side-by-side on lanes
    wbd_ref:  (PD, PD)     block-diagonal W^T (pre-transposed in wrapper; resident)
    b_ref:    (1, PD)      bias tiled per packed instance (-1e30 on padded features)
    gsum_ref: (PD, PD)     block-diagonal ones: e @ G = per-group sum, lane-broadcast
    sel_ref:  (PPB, R)     ones selection: row q sums rows q*S .. q*S+S-1 (MXU reduce)
    o_ref:    (1, PPB, PD) packed contexts
    """
    x = x_ref[0]                                                      # (R, PD) f32

    # scores = x @ W^T + b per packed instance (block-diagonal W^T -> one MXU dot).
    scores = jnp.dot(x, wbd_ref[...], preferred_element_type=jnp.float32) + b_ref[...]

    # Single per-row max over all PD lanes (common shift is exact per lane group).
    m = jnp.max(scores, axis=-1, keepdims=True)                       # (R, 1) XLU
    e = jnp.exp(scores - m)                                           # full-lane EUP

    # Per-group denominator on the MXU; result already broadcast across each group.
    denom = jnp.dot(e, gsum_ref[...], preferred_element_type=jnp.float32)
    denom = jnp.maximum(denom, jnp.float32(1e-30))    # guard: fully-underflowed group

    # Approximate reciprocal on the EUP + one Newton step -> ~f32 accuracy.
    r = pl.reciprocal(denom, approx=True)
    r = r * (2.0 - denom * r)
    probs = e * r

    # context[pack] = sum over that pack's S rows of probs * x  -> MXU matmul.
    o_ref[0] = jnp.dot(sel_ref[...], probs * x, preferred_element_type=jnp.float32)


def self_attention_forward(x, weight, bias, *, lane_width=None, max_ppb=64,
                           target_rows=512):
    """Batched SelfAttention forward (eval mode).

    x:      (N, S, D)  — N independent (batch_size == 1) module invocations
    weight: (D, D)     — nn.Linear weight (PyTorch layout: out_features x in_features)
    bias:   (D,)
    returns (N, D) contexts (dropout = identity / eval mode).
    """
    N, S, D = x.shape
    x = x.astype(jnp.float32)
    weight = weight.astype(jnp.float32)
    bias = bias.astype(jnp.float32)

    if lane_width is None:
        lane_width = _default_lane_width()

    # Lane packing: P instances of width Dp side-by-side. Pad D up to a power of two
    # (divides the lane width) rather than falling back to a lane-sparse P = 1 layout.
    if D <= lane_width:
        Dp = _next_pow2(D)
        P = lane_width // Dp
    else:
        Dp = _round_up(D, 128)
        P = 1
    PD = P * Dp

    if Dp != D:
        x = jnp.pad(x, ((0, 0), (0, 0), (0, Dp - D)))
        w_p = jnp.zeros((Dp, Dp), jnp.float32).at[:D, :D].set(weight)
        b_p = jnp.full((Dp,), _NEG_LARGE, jnp.float32).at[:D].set(bias)
    else:
        w_p, b_p = weight, bias

    packs_needed = -(-N // P)
    PPB = _choose_ppb(packs_needed, S, target_rows=target_rows, max_ppb=max_ppb)
    inst_per_block = P * PPB
    R = PPB * S

    num_blocks = -(-N // inst_per_block)
    Npad = num_blocks * inst_per_block
    if Npad != N:
        x = jnp.concatenate([x, jnp.zeros((Npad - N, S, Dp), jnp.float32)], axis=0)

    # (Npad, S, Dp) -> (num_blocks, R, PD). Instance n = g*PPB*P + q*P + p lands at
    # block g, rows q*S .. q*S+S-1, lanes p*Dp .. (p+1)*Dp.
    x_packed = (x.reshape(num_blocks, PPB, P, S, Dp)
                  .transpose(0, 1, 3, 2, 4)
                  .reshape(num_blocks, R, PD))

    # Resident constants (constant index_map -> DMA'd once, stay in VMEM).
    wbd = jnp.kron(jnp.eye(P, dtype=jnp.float32), w_p.T)                     # (PD, PD)
    gsum = jnp.kron(jnp.eye(P, dtype=jnp.float32),
                    jnp.ones((Dp, Dp), jnp.float32))                         # (PD, PD)
    b_packed = jnp.tile(b_p, P).reshape(1, PD)                               # (1, PD)
    sel = jnp.kron(jnp.eye(PPB, dtype=jnp.float32),
                   jnp.ones((1, S), jnp.float32))                            # (PPB, R)

    # Explicit scoped-VMEM budget: double-buffered x/out blocks + resident constants,
    # with headroom for intermediates / compiler scratch. Clamp to [16 MiB, 32 MiB]
    # (>= every generation's default, <= half of v7x's 64 MiB physical VMEM).
    est = 4 * (2 * R * PD + 2 * PPB * PD + 2 * PD * PD + PD + PPB * R)
    vmem_limit = int(min(32 * 1024 * 1024, max(16 * 1024 * 1024, 6 * est)))

    out = pl.pallas_call(
        _self_attention_kernel,
        out_shape=jax.ShapeDtypeStruct((num_blocks, PPB, PD), jnp.float32),
        grid_spec=pltpu.PrefetchScalarGridSpec(
            num_scalar_prefetch=0,
            grid=(num_blocks,),
            in_specs=[
                pl.BlockSpec((1, R, PD), lambda g: (g, 0, 0)),   # x (instance blocks)
                pl.BlockSpec((PD, PD), lambda g: (0, 0)),        # block-diag W^T
                pl.BlockSpec((1, PD), lambda g: (0, 0)),         # bias
                pl.BlockSpec((PD, PD), lambda g: (0, 0)),        # group-sum ones (G)
                pl.BlockSpec((PPB, R), lambda g: (0, 0)),        # seq-sum selector
            ],
            out_specs=pl.BlockSpec((1, PPB, PD), lambda g: (g, 0, 0)),
        ),
        compiler_params=pltpu.CompilerParams(
            dimension_semantics=("parallel",),   # independent blocks -> 2 TCs on v7x
            vmem_limit_bytes=vmem_limit,
        ),
    )(x_packed, wbd, b_packed, gsum, sel)

    # (num_blocks, PPB, P*Dp) flattens row-major straight to (Npad, Dp).
    return out.reshape(Npad, Dp)[:N, :D]


def _reference(x, weight, bias):
    """Pure-JAX reference: PyTorch forward (eval mode), applied per instance (B=1)."""
    def one(xi):                                  # xi: (S, D)
        scores = xi @ weight.T + bias
        scores = jax.nn.softmax(scores, axis=1)
        return jnp.sum(scores * xi, axis=0)       # (D,)
    return jax.vmap(one)(x)


if __name__ == "__main__":
    key = jax.random.PRNGKey(0)
    k_x, k_w, k_b, k_x2 = jax.random.split(key, 4)

    S, D = 8, 32
    # Deterministic nn.Linear-style init: U(-1/sqrt(D), 1/sqrt(D))
    bound = 1.0 / jnp.sqrt(jnp.float32(D))
    weight = jax.random.uniform(k_w, (D, D), jnp.float32, -bound, bound)
    bias = jax.random.uniform(k_b, (D,), jnp.float32, -bound, bound)

    # 16 independent (batch_size=1) module invocations batched into one pallas_call.
    N = 16
    x = jax.random.normal(k_x, (N, S, D), dtype=jnp.float32)
    out = jax.block_until_ready(self_attention_forward(x, weight, bias))
    ref = _reference(x, weight, bias)
    assert out.shape == (N, D), out.shape
    assert jnp.allclose(out, ref, atol=1e-5, rtol=1e-5), "mismatch vs reference (batched)"

    # The module's literal single-call shape: (1, S, D) -> (1, D) (padded internally).
    out1 = jax.block_until_ready(self_attention_forward(x[:1], weight, bias))
    assert out1.shape == (1, D), out1.shape
    assert jnp.allclose(out1, ref[:1], atol=1e-5, rtol=1e-5), "mismatch vs reference (single)"

    # Larger batch: exercises the big-block (PPB up to 64, R = 512) multi-step grid.
    N2 = 1024
    x2 = jax.random.normal(k_x2, (N2, S, D), dtype=jnp.float32)
    out2 = jax.block_until_ready(self_attention_forward(x2, weight, bias))
    ref2 = _reference(x2, weight, bias)
    assert out2.shape == (N2, D), out2.shape
    assert jnp.allclose(out2, ref2, atol=1e-5, rtol=1e-5), "mismatch vs reference (large batch)"

    print("KERNEL_OK")
</pallas_src>

<mosaic_0001>
module attributes {stable_mosaic.version = 11 : i64} {
  func.func @_self_attention_kernel(%arg0: i32, %arg1: memref<1x64x256xf32, #tpu.memory_space<vmem>>, %arg2: memref<256x256xf32, #tpu.memory_space<vmem>>, %arg3: memref<1x256xf32, #tpu.memory_space<vmem>>, %arg4: memref<256x256xf32, #tpu.memory_space<vmem>>, %arg5: memref<8x64xf32, #tpu.memory_space<vmem>>, %arg6: memref<1x8x256xf32, #tpu.memory_space<vmem>>) attributes {dimension_semantics = [#tpu.dimension_semantics<parallel>], iteration_bounds = array<i64: 1>, scalar_prefetch = 0 : i64, scratch_operands = 0 : i64, tpu.core_type = #tpu.core_type<tc>, window_params = [{transform_indices = @transform_0, window_bounds = array<i64: 1, 64, 256>}, {pipeline_mode = #tpu.pipeline_mode<synchronous>, transform_indices = @transform_1, window_bounds = array<i64: 256, 256>}, {pipeline_mode = #tpu.pipeline_mode<synchronous>, transform_indices = @transform_2, window_bounds = array<i64: 1, 256>}, {pipeline_mode = #tpu.pipeline_mode<synchronous>, transform_indices = @transform_3, window_bounds = array<i64: 256, 256>}, {pipeline_mode = #tpu.pipeline_mode<synchronous>, transform_indices = @transform_4, window_bounds = array<i64: 8, 64>}, {transform_indices = @transform_5, window_bounds = array<i64: 1, 8, 256>}]} {
    %c0 = arith.constant 0 : index
    %c0_0 = arith.constant 0 : index
    %c0_1 = arith.constant 0 : index
    %0 = vector.load %arg1[%c0, %c0_0, %c0_1] : memref<1x64x256xf32, #tpu.memory_space<vmem>>, vector<1x64x256xf32>
    %1 = vector.shape_cast %0 : vector<1x64x256xf32> to vector<64x256xf32>
    %c0_2 = arith.constant 0 : index
    %c0_3 = arith.constant 0 : index
    %2 = vector.load %arg2[%c0_2, %c0_3] : memref<256x256xf32, #tpu.memory_space<vmem>>, vector<256x256xf32>
    %cst = arith.constant dense<0.000000e+00> : vector<64x256xf32>
    %3 = tpu.matmul %1, %2, %cst {dimension_numbers = #tpu.dot_dimension_numbers<[1], [0], [0], [1], [0, 0, 1, 1], [], []>} : vector<64x256xf32>, vector<256x256xf32>, vector<64x256xf32> -> vector<64x256xf32>
    %c0_4 = arith.constant 0 : index
    %c0_5 = arith.constant 0 : index
    %4 = vector.load %arg3[%c0_4, %c0_5] : memref<1x256xf32, #tpu.memory_space<vmem>>, vector<1x256xf32>
    %5 = vector.broadcast %4 : vector<1x256xf32> to vector<64x256xf32>
    %6 = arith.addf %3, %5 : vector<64x256xf32>
    %cst_6 = arith.constant dense<0xFF800000> : vector<64xf32>
    %7 = vector.multi_reduction <maximumf>, %6, %cst_6 [1] : vector<64x256xf32> to vector<64xf32>
    %8 = vector.shape_cast %7 : vector<64xf32> to vector<64x1xf32>
    %9 = vector.broadcast %8 : vector<64x1xf32> to vector<64x256xf32>
    %10 = arith.subf %6, %9 : vector<64x256xf32>
    %11 = math.exp %10 : vector<64x256xf32>
    %c0_7 = arith.constant 0 : index
    %c0_8 = arith.constant 0 : index
    %12 = vector.load %arg4[%c0_7, %c0_8] : memref<256x256xf32, #tpu.memory_space<vmem>>, vector<256x256xf32>
    %cst_9 = arith.constant dense<0.000000e+00> : vector<64x256xf32>
    %13 = tpu.matmul %11, %12, %cst_9 {dimension_numbers = #tpu.dot_dimension_numbers<[1], [0], [0], [1], [0, 0, 1, 1], [], []>} : vector<64x256xf32>, vector<256x256xf32>, vector<64x256xf32> -> vector<64x256xf32>
    %cst_10 = arith.constant 1.000000e-30 : f32
    %14 = vector.broadcast %cst_10 : f32 to vector<64x256xf32>
    %15 = arith.maximumf %13, %14 : vector<64x256xf32>
    %16 = tpu.reciprocal %15 {approx = true} : vector<64x256xf32> -> vector<64x256xf32>
    %17 = arith.mulf %15, %16 : vector<64x256xf32>
    %cst_11 = arith.constant 2.000000e+00 : f32
    %18 = vector.broadcast %cst_11 : f32 to vector<64x256xf32>
    %19 = arith.subf %18, %17 : vector<64x256xf32>
    %20 = arith.mulf %16, %19 : vector<64x256xf32>
    %21 = arith.mulf %11, %20 : vector<64x256xf32>
    %c0_12 = arith.constant 0 : index
    %c0_13 = arith.constant 0 : index
    %22 = vector.load %arg5[%c0_12, %c0_13] : memref<8x64xf32, #tpu.memory_space<vmem>>, vector<8x64xf32>
    %23 = arith.mulf %21, %1 : vector<64x256xf32>
    %cst_14 = arith.constant dense<0.000000e+00> : vector<8x256xf32>
    %24 = tpu.matmul %22, %23, %cst_14 {dimension_numbers = #tpu.dot_dimension_numbers<[1], [0], [0], [1], [0, 0, 1, 1], [], []>} : vector<8x64xf32>, vector<64x256xf32>, vector<8x256xf32> -> vector<8x256xf32>
    %c0_15 = arith.constant 0 : index
    %c0_16 = arith.constant 0 : index
    %c0_17 = arith.constant 0 : index
    %25 = vector.load %arg6[%c0_15, %c0_16, %c0_17] : memref<1x8x256xf32, #tpu.memory_space<vmem>>, vector<1x8x256xf32>
    %26 = vector.shape_cast %25 : vector<1x8x256xf32> to vector<8x256xf32>
    %27 = vector.shape_cast %24 : vector<8x256xf32> to vector<1x8x256xf32>
    tpu.vector_store %arg6[%c0_15, %c0_16, %c0_17], %27 {strides = array<i32>} : memref<1x8x256xf32, #tpu.memory_space<vmem>>, vector<1x8x256xf32>,
    return
  }
  func.func @transform_0(%arg0: i32) -> (i32, i32, i32) {
    %c0_i32 = arith.constant 0 : i32
    %c0_i32_0 = arith.constant 0 : i32
    %c0_i32_1 = arith.constant 0 : i32
    return %arg0, %c0_i32, %c0_i32_0 : i32, i32, i32
  }
  func.func @transform_1(%arg0: i32) -> (i32, i32) {
    %c0_i32 = arith.constant 0 : i32
    %c0_i32_0 = arith.constant 0 : i32
    %c0_i32_1 = arith.constant 0 : i32
    return %c0_i32, %c0_i32_0 : i32, i32
  }
  func.func @transform_2(%arg0: i32) -> (i32, i32) {
    %c0_i32 = arith.constant 0 : i32
    %c0_i32_0 = arith.constant 0 : i32
    %c0_i32_1 = arith.constant 0 : i32
    return %c0_i32, %c0_i32_0 : i32, i32
  }
  func.func @transform_3(%arg0: i32) -> (i32, i32) {
    %c0_i32 = arith.constant 0 : i32
    %c0_i32_0 = arith.constant 0 : i32
    %c0_i32_1 = arith.constant 0 : i32
    return %c0_i32, %c0_i32_0 : i32, i32
  }
  func.func @transform_4(%arg0: i32) -> (i32, i32) {
    %c0_i32 = arith.constant 0 : i32
    %c0_i32_0 = arith.constant 0 : i32
    %c0_i32_1 = arith.constant 0 : i32
    return %c0_i32, %c0_i32_0 : i32, i32
  }
  func.func @transform_5(%arg0: i32) -> (i32, i32, i32) {
    %c0_i32 = arith.constant 0 : i32
    %c0_i32_0 = arith.constant 0 : i32
    %c0_i32_1 = arith.constant 0 : i32
    return %arg0, %c0_i32, %c0_i32_0 : i32, i32, i32
  }
}

</mosaic_0001>

<llo_original>
// kernel: tpu_custom_call.1
$region0: #{tpu_custom_call.1}
  #allocation0 [shape = 'u32[]', space=smem, size = 0x4, offset = 0x4, fixed_abs, tag = 'smem constant byte address 0x4 - core index']
  #allocation1 [shape = 'u32[144,128]{1,0:T(1,128)}', space=vmem, size = 0x12000, scoped, tag = 'internal scratch']
  %s0 = inlined_call_operand.hbm [shape: f32[1,64,256], index: 0, kind: input, shape index: {}]
  %s1 = inlined_call_operand.hbm [shape: f32[256,256], index: 1, kind: input, shape index: {}]
  %s2 = inlined_call_operand.vmem [shape: f32[1,256], index: 2, kind: input, shape index: {}]
  %s3 = inlined_call_operand.hbm [shape: f32[256,256], index: 3, kind: input, shape index: {}]
  %s4 = inlined_call_operand.vmem [shape: f32[8,64], index: 4, kind: input, shape index: {}]
  %s5 = inlined_call_operand.hbm [shape: f32[1,8,256], index: 5, kind: output, shape index: {}]
  %s6 = sld [smem:[#allocation0]]
  $region42: #{tpu_custom_call.1} parent=0
    _
  %s8 = ssub.s32 1, %s6
  %s9 = scalar_select 0, %s8, %s6
  $region1: #{tpu_custom_call.1} parent=0
    #allocation2 [shape = 'u8[65536]{0}', space=vmem, size = 0x10000, scoped, tag = 'input window, operand 0, single buffered']
    #allocation3 [shape = 's32[1]{0}', space=sflag, size = 0x4, scoped, tag = 'scoped memory for tpu_custom_call.1']
    #allocation4 [shape = 's32[1]{0}', space=sflag, size = 0x4, scoped, tag = 'scoped memory for tpu_custom_call.1']
    #allocation5 [shape = 'u8[262144]{0}', space=vmem, size = 0x40000, scoped, tag = 'input window, operand 1, single buffered']
    #allocation6 [shape = 's32[1]{0}', space=sflag, size = 0x4, scoped, tag = 'scoped memory for tpu_custom_call.1']
    #allocation7 [shape = 'u8[262144]{0}', space=vmem, size = 0x40000, scoped, tag = 'input window, operand 3, single buffered']
    #allocation8 [shape = 'u8[8192]{0}', space=vmem, size = 0x2000, scoped, tag = 'output window, operand 0, single buffered']
    %10 = vsyncpa [#allocation3], 0
    %11 = vsyncpa [#allocation6], 0
    %12 = vsyncpa [#allocation4], 0
    // Predicated region
    $region2: #{tpu_custom_call.1} parent=1 // pred_check
      _
    $region3: #{tpu_custom_call.1} parent=1 // pred_check_branch
      %14 = sbr.rel (0) target = $region5
    $region4: #{tpu_custom_call.1} parent=1 // pred_region
      %s16 = ssub.s32 2048, 2048
      %17 = vsyncadd [#allocation3], %s16
      %s18 = sshll.u32 [#allocation2], 4
      %s19 = int_to_ptr.vmem [resolvable:$true] %s18
      %24 = dma.hbm_to_vmem [thread:$0]  %s0, 2048, %s19, [#allocation3], 256, 256, 16
    $region5: #{tpu_custom_call.1} parent=1 // pred_fallthru
      _
    // Predicated region
    $region6: #{tpu_custom_call.1} parent=1 // pred_check
      _
    $region7: #{tpu_custom_call.1} parent=1 // pred_check_branch
      %26 = sbr.rel (0) target = $region9
    $region8: #{tpu_custom_call.1} parent=1 // pred_region
      %s28 = ssub.s32 8192, 8192
      %29 = vsyncadd [#allocation6], %s28
      %s30 = sshll.u32 [#allocation5], 4
      %s31 = int_to_ptr.vmem [resolvable:$true] %s30
      %36 = dma.hbm_to_vmem [thread:$0]  %s1, 8192, %s31, [#allocation6], 256, 256, 16
    $region9: #{tpu_custom_call.1} parent=1 // pred_fallthru
      _
    // Predicated region
    $region10: #{tpu_custom_call.1} parent=1 // pred_check
      _
    $region11: #{tpu_custom_call.1} parent=1 // pred_check_branch
      %38 = sbr.rel (0) target = $region13
    $region12: #{tpu_custom_call.1} parent=1 // pred_region
      _
    $region13: #{tpu_custom_call.1} parent=1 // pred_fallthru
      _
    // Predicated region
    $region14: #{tpu_custom_call.1} parent=1 // pred_check
      _
    $region15: #{tpu_custom_call.1} parent=1 // pred_check_branch
      %40 = sbr.rel (0) target = $region17
    $region16: #{tpu_custom_call.1} parent=1 // pred_region
      %s42 = ssub.s32 8192, 8192
      %43 = vsyncadd [#allocation6], %s42
      %s44 = sshll.u32 [#allocation7], 4
      %s45 = int_to_ptr.vmem [resolvable:$true] %s44
      %50 = dma.hbm_to_vmem [thread:$0]  %s3, 8192, %s45, [#allocation6], 256, 256, 16
    $region17: #{tpu_custom_call.1} parent=1 // pred_fallthru
      _
    // Predicated region
    $region18: #{tpu_custom_call.1} parent=1 // pred_check
      _
    $region19: #{tpu_custom_call.1} parent=1 // pred_check_branch
      %52 = sbr.rel (0) target = $region21
    $region20: #{tpu_custom_call.1} parent=1 // pred_region
      _
    $region21: #{tpu_custom_call.1} parent=1 // pred_fallthru
      _
    // Predicated region
    $region22: #{tpu_custom_call.1} parent=1 // pred_check
      _
    $region23: #{tpu_custom_call.1} parent=1 // pred_check_branch
      %54 = sbr.rel (0) target = $region25
    $region24: #{tpu_custom_call.1} parent=1 // pred_region
      %55 = dma.done [#allocation3], 2048
    $region25: #{tpu_custom_call.1} parent=1 // pred_fallthru
      _
    // Predicated region
    $region26: #{tpu_custom_call.1} parent=1 // pred_check
      _
    $region27: #{tpu_custom_call.1} parent=1 // pred_check_branch
      %57 = sbr.rel (0) target = $region29
    $region28: #{tpu_custom_call.1} parent=1 // pred_region
      %58 = dma.done [#allocation6], 8192
    $region29: #{tpu_custom_call.1} parent=1 // pred_fallthru
      _
    // Predicated region
    $region30: #{tpu_custom_call.1} parent=1 // pred_check
      _
    $region31: #{tpu_custom_call.1} parent=1 // pred_check_branch
      %60 = sbr.rel (0) target = $region33
    $region32: #{tpu_custom_call.1} parent=1 // pred_region
      %61 = dma.done [#allocation6], 8192
    $region33: #{tpu_custom_call.1} parent=1 // pred_fallthru
      _
    %v62 = vld [vmem:[#allocation2] sm:$0xff]
    %v63 = vld [vmem:[#allocation2 + $0x8] sm:$0xff]
    %v64 = vld [vmem:[#allocation2 + $0x10] sm:$0xff]
    %v65 = vld [vmem:[#allocation2 + $0x18] sm:$0xff]
    %v66 = vld [vmem:[#allocation2 + $0x20] sm:$0xff]
    %v67 = vld [vmem:[#allocation2 + $0x28] sm:$0xff]
    %v68 = vld [vmem:[#allocation2 + $0x30] sm:$0xff]
    %v69 = vld [vmem:[#allocation2 + $0x38] sm:$0xff]
    %v70 = vld [vmem:[#allocation2 + $0x40] sm:$0xff]
    %v71 = vld [vmem:[#allocation2 + $0x48] sm:$0xff]
    %v72 = vld [vmem:[#allocation2 + $0x50] sm:$0xff]
    %v73 = vld [vmem:[#allocation2 + $0x58] sm:$0xff]
    %v74 = vld [vmem:[#allocation2 + $0x60] sm:$0xff]
    %v75 = vld [vmem:[#allocation2 + $0x68] sm:$0xff]
    %v76 = vld [vmem:[#allocation2 + $0x70] sm:$0xff]
    %v77 = vld [vmem:[#allocation2 + $0x78] sm:$0xff]
    %v78 = vld [vmem:[#allocation5] sm:$0xff]
    %v79 = vld [vmem:[#allocation5 + $0x8] sm:$0xff]
    %v80 = vld [vmem:[#allocation5 + $0x10] sm:$0xff]
    %v81 = vld [vmem:[#allocation5 + $0x18] sm:$0xff]
    %v82 = vld [vmem:[#allocation5 + $0x20] sm:$0xff]
    %v83 = vld [vmem:[#allocation5 + $0x28] sm:$0xff]
    %v84 = vld [vmem:[#allocation5 + $0x30] sm:$0xff]
    %v85 = vld [vmem:[#allocation5 + $0x38] sm:$0xff]
    %v86 = vld [vmem:[#allocation5 + $0x40] sm:$0xff]
    %v87 = vld [vmem:[#allocation5 + $0x48] sm:$0xff]
    %v88 = vld [vmem:[#allocation5 + $0x50] sm:$0xff]
    %v89 = vld [vmem:[#allocation5 + $0x58] sm:$0xff]
    %v90 = vld [vmem:[#allocation5 + $0x60] sm:$0xff]
    %v91 = vld [vmem:[#allocation5 + $0x68] sm:$0xff]
    %v92 = vld [vmem:[#allocation5 + $0x70] sm:$0xff]
    %v93 = vld [vmem:[#allocation5 + $0x78] sm:$0xff]
    %v94 = vld [vmem:[#allocation5 + $0x80] sm:$0xff]
    %v95 = vld [vmem:[#allocation5 + $0x88] sm:$0xff]
    %v96 = vld [vmem:[#allocation5 + $0x90] sm:$0xff]
    %v97 = vld [vmem:[#allocation5 + $0x98] sm:$0xff]
    %v98 = vld [vmem:[#allocation5 + $0xa0] sm:$0xff]
    %v99 = vld [vmem:[#allocation5 + $0xa8] sm:$0xff]
    %v100 = vld [vmem:[#allocation5 + $0xb0] sm:$0xff]
    %v101 = vld [vmem:[#allocation5 + $0xb8] sm:$0xff]
    %v102 = vld [vmem:[#allocation5 + $0xc0] sm:$0xff]
    %v103 = vld [vmem:[#allocation5 + $0xc8] sm:$0xff]
    %v104 = vld [vmem:[#allocation5 + $0xd0] sm:$0xff]
    %v105 = vld [vmem:[#allocation5 + $0xd8] sm:$0xff]
    %v106 = vld [vmem:[#allocation5 + $0xe0] sm:$0xff]
    %v107 = vld [vmem:[#allocation5 + $0xe8] sm:$0xff]
    %v108 = vld [vmem:[#allocation5 + $0xf0] sm:$0xff]
    %v109 = vld [vmem:[#allocation5 + $0xf8] sm:$0xff]
    %v110 = vld [vmem:[#allocation5 + $0x100] sm:$0xff]
    %v111 = vld [vmem:[#allocation5 + $0x108] sm:$0xff]
    %v112 = vld [vmem:[#allocation5 + $0x110] sm:$0xff]
    %v113 = vld [vmem:[#allocation5 + $0x118] sm:$0xff]
    %v114 = vld [vmem:[#allocation5 + $0x120] sm:$0xff]
    %v115 = vld [vmem:[#allocation5 + $0x128] sm:$0xff]
    %v116 = vld [vmem:[#allocation5 + $0x130] sm:$0xff]
    %v117 = vld [vmem:[#allocation5 + $0x138] sm:$0xff]
    %v118 = vld [vmem:[#allocation5 + $0x140] sm:$0xff]
    %v119 = vld [vmem:[#allocation5 + $0x148] sm:$0xff]
    %v120 = vld [vmem:[#allocation5 + $0x150] sm:$0xff]
    %v121 = vld [vmem:[#allocation5 + $0x158] sm:$0xff]
    %v122 = vld [vmem:[#allocation5 + $0x160] sm:$0xff]
    %v123 = vld [vmem:[#allocation5 + $0x168] sm:$0xff]
    %v124 = vld [vmem:[#allocation5 + $0x170] sm:$0xff]
    %v125 = vld [vmem:[#allocation5 + $0x178] sm:$0xff]
    %v126 = vld [vmem:[#allocation5 + $0x180] sm:$0xff]
    %v127 = vld [vmem:[#allocation5 + $0x188] sm:$0xff]
    %v128 = vld [vmem:[#allocation5 + $0x190] sm:$0xff]
    %v129 = vld [vmem:[#allocation5 + $0x198] sm:$0xff]
    %v130 = vld [vmem:[#allocation5 + $0x1a0] sm:$0xff]
    %v131 = vld [vmem:[#allocation5 + $0x1a8] sm:$0xff]
    %v132 = vld [vmem:[#allocation5 + $0x1b0] sm:$0xff]
    %v133 = vld [vmem:[#allocation5 + $0x1b8] sm:$0xff]
    %v134 = vld [vmem:[#allocation5 + $0x1c0] sm:$0xff]
    %v135 = vld [vmem:[#allocation5 + $0x1c8] sm:$0xff]
    %v136 = vld [vmem:[#allocation5 + $0x1d0] sm:$0xff]
    %v137 = vld [vmem:[#allocation5 + $0x1d8] sm:$0xff]
    %v138 = vld [vmem:[#allocation5 + $0x1e0] sm:$0xff]
    %v139 = vld [vmem:[#allocation5 + $0x1e8] sm:$0xff]
    %v140 = vld [vmem:[#allocation5 + $0x1f0] sm:$0xff]
    %v141 = vld [vmem:[#allocation5 + $0x1f8] sm:$0xff]
    %v142 = vld [vmem:[%s2] sm:$0x3]
    %v144 = vlaneseq
    %v145 = vshrl.u32 %v144, 7
    %v146 = vsub.s32 0, %v145
    %v147 = vrot.slane %v142, %v146
    %v148 = vlaneseq
    %v149 = vshrl.u32 %v148, 7
    %v150 = vsub.s32 1, %v149
    %v151 = vrot.slane %v142, %v150
    %154 = vmatprep.subr.mxu0 %v79
    %155 = vmatpush1.msra.mxu0 %v78
    %156 = vmatprep.subr.mxu0 %v81
    %157 = vmatpush1.msra.mxu0 %v80
    %158 = vmatprep.subr.mxu0 %v83
    %159 = vmatpush1.msra.mxu0 %v82
    %160 = vmatprep.subr.mxu0 %v85
    %161 = vmatpush1.msra.mxu0 %v84
    %162 = vmatprep.subr.mxu0 %v87
    %163 = vmatpush1.msra.mxu0 %v86
    %164 = vmatprep.subr.mxu0 %v89
    %165 = vmatpush1.msra.mxu0 %v88
    %166 = vmatprep.subr.mxu0 %v91
    %167 = vmatpush1.msra.mxu0 %v90
    %168 = vmatprep.subr.mxu0 %v93
    %169 = vmatpush1.msra.mxu0 %v92
    %170 = vmatprep.subr.mxu0 %v95
    %171 = vmatpush1.msra.mxu0 %v94
    %172 = vmatprep.subr.mxu0 %v97
    %173 = vmatpush1.msra.mxu0 %v96
    %174 = vmatprep.subr.mxu0 %v99
    %175 = vmatpush1.msra.mxu0 %v98
    %176 = vmatprep.subr.mxu0 %v101
    %177 = vmatpush1.msra.mxu0 %v100
    %178 = vmatprep.subr.mxu0 %v103
    %179 = vmatpush1.msra.mxu0 %v102
    %180 = vmatprep.subr.mxu0 %v105
    %181 = vmatpush1.msra.mxu0 %v104
    %182 = vmatprep.subr.mxu0 %v107
    %183 = vmatpush1.msra.mxu0 %v106
    %184 = vmatprep.subr.mxu0 %v109
    %185 = vmatpush1.msra.mxu0 %v108
    %186 = vmatprep.subr.mxu0 %v111
    %187 = vmatpush1.msra.mxu0 %v110
    %188 = vmatprep.subr.mxu0 %v113
    %189 = vmatpush1.msra.mxu0 %v112
    %190 = vmatprep.subr.mxu0 %v115
    %191 = vmatpush1.msra.mxu0 %v114
    %192 = vmatprep.subr.mxu0 %v117
    %193 = vmatpush1.msra.mxu0 %v116
    %194 = vmatprep.subr.mxu0 %v119
    %195 = vmatpush1.msra.mxu0 %v118
    %196 = vmatprep.subr.mxu0 %v121
    %197 = vmatpush1.msra.mxu0 %v120
    %198 = vmatprep.subr.mxu0 %v123
    %199 = vmatpush1.msra.mxu0 %v122
    %200 = vmatprep.subr.mxu0 %v125
    %201 = vmatpush1.msra.mxu0 %v124
    %202 = vmatprep.subr.mxu0 %v127
    %203 = vmatpush1.msra.mxu0 %v126
    %204 = vmatprep.subr.mxu0 %v129
    %205 = vmatpush1.msra.mxu0 %v128
    %206 = vmatprep.subr.mxu0 %v131
    %207 = vmatpush1.msra.mxu0 %v130
    %208 = vmatprep.subr.mxu0 %v133
    %209 = vmatpush1.msra.mxu0 %v132
    %210 = vmatprep.subr.mxu0 %v135
    %211 = vmatpush1.msra.mxu0 %v134
    %212 = vmatprep.subr.mxu0 %v137
    %213 = vmatpush1.msra.mxu0 %v136
    %214 = vmatprep.subr.mxu0 %v139
    %215 = vmatpush1.msra.mxu0 %v138
    %216 = vmatprep.subr.mxu0 %v141
    %217 = vmatpush1.msra.mxu0 %v140
    %218 = vmatprep.mubr.f32.mxu0 %v63
    %219 = vmatmul.mubr.f32.gmra.mrb[0].mxu0 %v62
    %v220 = vpop.f32.mrb[0].mxu0
    %v221 = vadd.f32 %v147, %v220
    %v222 = vpop.f32.mrb[0].mxu0
    %v223 = vadd.f32 %v151, %v222
    %224 = vmatprep.mubr.f32.mxu0 %v65
    %225 = vmatmul.mubr.f32.gmra.mrb[0].mxu0 %v64
    %v226 = vpop.f32.mrb[0].mxu0
    %v227 = vadd.f32 %v147, %v226
    %v228 = vpop.f32.mrb[0].mxu0
    %v229 = vadd.f32 %v151, %v228
    %230 = vmatprep.mubr.f32.mxu0 %v67
    %231 = vmatmul.mubr.f32.gmra.mrb[0].mxu0 %v66
    %v232 = vpop.f32.mrb[0].mxu0
    %v233 = vadd.f32 %v147, %v232
    %v234 = vpop.f32.mrb[0].mxu0
    %v235 = vadd.f32 %v151, %v234
    %236 = vmatprep.mubr.f32.mxu0 %v69
    %237 = vmatmul.mubr.f32.gmra.mrb[0].mxu0 %v68
    %v238 = vpop.f32.mrb[0].mxu0
    %v239 = vadd.f32 %v147, %v238
    %v240 = vpop.f32.mrb[0].mxu0
    %v241 = vadd.f32 %v151, %v240
    %242 = vmatprep.mubr.f32.mxu0 %v71
    %243 = vmatmul.mubr.f32.gmra.mrb[0].mxu0 %v70
    %v244 = vpop.f32.mrb[0].mxu0
    %v245 = vadd.f32 %v147, %v244
    %v246 = vpop.f32.mrb[0].mxu0
    %v247 = vadd.f32 %v151, %v246
    %248 = vmatprep.mubr.f32.mxu0 %v73
    %249 = vmatmul.mubr.f32.gmra.mrb[0].mxu0 %v72
    %v250 = vpop.f32.mrb[0].mxu0
    %v251 = vadd.f32 %v147, %v250
    %v252 = vpop.f32.mrb[0].mxu0
    %v253 = vadd.f32 %v151, %v252
    %254 = vmatprep.mubr.f32.mxu0 %v75
    %255 = vmatmul.mubr.f32.gmra.mrb[0].mxu0 %v74
    %v256 = vpop.f32.mrb[0].mxu0
    %v257 = vadd.f32 %v147, %v256
    %v258 = vpop.f32.mrb[0].mxu0
    %v259 = vadd.f32 %v151, %v258
    %260 = vmatprep.mubr.f32.mxu0 %v77
    %261 = vmatmul.mubr.f32.gmra.mrb[0].mxu0 %v76
    %v262 = vpop.f32.mrb[0].mxu0
    %v263 = vadd.f32 %v147, %v262
    %v264 = vpop.f32.mrb[0].mxu0
    %v265 = vadd.f32 %v151, %v264
    %266 = vdwg.mxu0
    %v267 = vmax.f32 %v221, %v223
    %268 = vmax.xlane.f32.xlu0 %v267
    %v269 = vpop.xlane.xlu0 %268
    %v270 = vmax.f32 %v227, %v229
    %271 = vmax.xlane.f32.xlu0 %v270
    %v272 = vpop.xlane.xlu0 %271
    %v273 = vmax.f32 %v233, %v235
    %274 = vmax.xlane.f32.xlu0 %v273
    %v275 = vpop.xlane.xlu0 %274
    %v276 = vmax.f32 %v239, %v241
    %277 = vmax.xlane.f32.xlu0 %v276
    %v278 = vpop.xlane.xlu0 %277
    %v279 = vmax.f32 %v245, %v247
    %280 = vmax.xlane.f32.xlu0 %v279
    %v281 = vpop.xlane.xlu0 %280
    %v282 = vmax.f32 %v251, %v253
    %283 = vmax.xlane.f32.xlu0 %v282
    %v284 = vpop.xlane.xlu0 %283
    %v285 = vmax.f32 %v257, %v259
    %286 = vmax.xlane.f32.xlu0 %v285
    %v287 = vpop.xlane.xlu0 %286
    %v288 = vmax.f32 %v263, %v265
    %289 = vmax.xlane.f32.xlu0 %v288
    %v290 = vpop.xlane.xlu0 %289
    %v291 = vsub.f32 %v221, %v269
    %v292 = vsub.f32 %v223, %v269
    %v293 = vsub.f32 %v227, %v272
    %v294 = vsub.f32 %v229, %v272
    %v295 = vsub.f32 %v233, %v275
    %v296 = vsub.f32 %v235, %v275
    %v297 = vsub.f32 %v239, %v278
    %v298 = vsub.f32 %v241, %v278
    %v299 = vsub.f32 %v245, %v281
    %v300 = vsub.f32 %v247, %v281
    %v301 = vsub.f32 %v251, %v284
    %v302 = vsub.f32 %v253, %v284
    %v303 = vsub.f32 %v257, %v287
    %v304 = vsub.f32 %v259, %v287
    %v305 = vsub.f32 %v263, %v290
    %v306 = vsub.f32 %v265, %v290
    %v307 = vmul.f32 %v291, 1.442695
    %v308 = vpow.pop %v307
    %v309 = vmul.f32 %v292, 1.442695
    %v310 = vpow.pop %v309
    %v311 = vmul.f32 %v293, 1.442695
    %v312 = vpow.pop %v311
    %v313 = vmul.f32 %v294, 1.442695
    %v314 = vpow.pop %v313
    %v315 = vmul.f32 %v295, 1.442695
    %v316 = vpow.pop %v315
    %v317 = vmul.f32 %v296, 1.442695
    %v318 = vpow.pop %v317
    %v319 = vmul.f32 %v297, 1.442695
    %v320 = vpow.pop %v319
    %v321 = vmul.f32 %v298, 1.442695
    %v322 = vpow.pop %v321
    %v323 = vmul.f32 %v299, 1.442695
    %v324 = vpow.pop %v323
    %v325 = vmul.f32 %v300, 1.442695
    %v326 = vpow.pop %v325
    %v327 = vmul.f32 %v301, 1.442695
    %v328 = vpow.pop %v327
    %v329 = vmul.f32 %v302, 1.442695
    %v330 = vpow.pop %v329
    %v331 = vmul.f32 %v303, 1.442695
    %v332 = vpow.pop %v331
    %v333 = vmul.f32 %v304, 1.442695
    %v334 = vpow.pop %v333
    %v335 = vmul.f32 %v305, 1.442695
    %v336 = vpow.pop %v335
    %v337 = vmul.f32 %v306, 1.442695
    %v338 = vpow.pop %v337
    %v339 = vld [vmem:[#allocation7] sm:$0xff]
    %v340 = vld [vmem:[#allocation7 + $0x8] sm:$0xff]
    %v341 = vld [vmem:[#allocation7 + $0x10] sm:$0xff]
    %v342 = vld [vmem:[#allocation7 + $0x18] sm:$0xff]
    %v343 = vld [vmem:[#allocation7 + $0x20] sm:$0xff]
    %v344 = vld [vmem:[#allocation7 + $0x28] sm:$0xff]
    %v345 = vld [vmem:[#allocation7 + $0x30] sm:$0xff]
    %v346 = vld [vmem:[#allocation7 + $0x38] sm:$0xff]
    %v347 = vld [vmem:[#allocation7 + $0x40] sm:$0xff]
    %v348 = vld [vmem:[#allocation7 + $0x48] sm:$0xff]
    %v349 = vld [vmem:[#allocation7 + $0x50] sm:$0xff]
    %v350 = vld [vmem:[#allocation7 + $0x58] sm:$0xff]
    %v351 = vld [vmem:[#allocation7 + $0x60] sm:$0xff]
    %v352 = vld [vmem:[#allocation7 + $0x68] sm:$0xff]
    %v353 = vld [vmem:[#allocation7 + $0x70] sm:$0xff]
    %v354 = vld [vmem:[#allocation7 + $0x78] sm:$0xff]
    %v355 = vld [vmem:[#allocation7 + $0x80] sm:$0xff]
    %v356 = vld [vmem:[#allocation7 + $0x88] sm:$0xff]
    %v357 = vld [vmem:[#allocation7 + $0x90] sm:$0xff]
    %v358 = vld [vmem:[#allocation7 + $0x98] sm:$0xff]
    %v359 = vld [vmem:[#allocation7 + $0xa0] sm:$0xff]
    %v360 = vld [vmem:[#allocation7 + $0xa8] sm:$0xff]
    %v361 = vld [vmem:[#allocation7 + $0xb0] sm:$0xff]
    %v362 = vld [vmem:[#allocation7 + $0xb8] sm:$0xff]
    %v363 = vld [vmem:[#allocation7 + $0xc0] sm:$0xff]
    %v364 = vld [vmem:[#allocation7 + $0xc8] sm:$0xff]
    %v365 = vld [vmem:[#allocation7 + $0xd0] sm:$0xff]
    %v366 = vld [vmem:[#allocation7 + $0xd8] sm:$0xff]
    %v367 = vld [vmem:[#allocation7 + $0xe0] sm:$0xff]
    %v368 = vld [vmem:[#allocation7 + $0xe8] sm:$0xff]
    %v369 = vld [vmem:[#allocation7 + $0xf0] sm:$0xff]
    %v370 = vld [vmem:[#allocation7 + $0xf8] sm:$0xff]
    %v371 = vld [vmem:[#allocation7 + $0x100] sm:$0xff]
    %v372 = vld [vmem:[#allocation7 + $0x108] sm:$0xff]
    %v373 = vld [vmem:[#allocation7 + $0x110] sm:$0xff]
    %v374 = vld [vmem:[#allocation7 + $0x118] sm:$0xff]
    %v375 = vld [vmem:[#allocation7 + $0x120] sm:$0xff]
    %v376 = vld [vmem:[#allocation7 + $0x128] sm:$0xff]
    %v377 = vld [vmem:[#allocation7 + $0x130] sm:$0xff]
    %v378 = vld [vmem:[#allocation7 + $0x138] sm:$0xff]
    %v379 = vld [vmem:[#allocation7 + $0x140] sm:$0xff]
    %v380 = vld [vmem:[#allocation7 + $0x148] sm:$0xff]
    %v381 = vld [vmem:[#allocation7 + $0x150] sm:$0xff]
    %v382 = vld [vmem:[#allocation7 + $0x158] sm:$0xff]
    %v383 = vld [vmem:[#allocation7 + $0x160] sm:$0xff]
    %v384 = vld [vmem:[#allocation7 + $0x168] sm:$0xff]
    %v385 = vld [vmem:[#allocation7 + $0x170] sm:$0xff]
    %v386 = vld [vmem:[#allocation7 + $0x178] sm:$0xff]
    %v387 = vld [vmem:[#allocation7 + $0x180] sm:$0xff]
    %v388 = vld [vmem:[#allocation7 + $0x188] sm:$0xff]
    %v389 = vld [vmem:[#allocation7 + $0x190] sm:$0xff]
    %v390 = vld [vmem:[#allocation7 + $0x198] sm:$0xff]
    %v391 = vld [vmem:[#allocation7 + $0x1a0] sm:$0xff]
    %v392 = vld [vmem:[#allocation7 + $0x1a8] sm:$0xff]
    %v393 = vld [vmem:[#allocation7 + $0x1b0] sm:$0xff]
    %v394 = vld [vmem:[#allocation7 + $0x1b8] sm:$0xff]
    %v395 = vld [vmem:[#allocation7 + $0x1c0] sm:$0xff]
    %v396 = vld [vmem:[#allocation7 + $0x1c8] sm:$0xff]
    %v397 = vld [vmem:[#allocation7 + $0x1d0] sm:$0xff]
    %v398 = vld [vmem:[#allocation7 + $0x1d8] sm:$0xff]
    %v399 = vld [vmem:[#allocation7 + $0x1e0] sm:$0xff]
    %v400 = vld [vmem:[#allocation7 + $0x1e8] sm:$0xff]
    %v401 = vld [vmem:[#allocation7 + $0x1f0] sm:$0xff]
    %v402 = vld [vmem:[#allocation7 + $0x1f8] sm:$0xff]
    %403 = vmatprep.subr.mxu0 %v340
    %404 = vmatpush1.msra.mxu0 %v339
    %405 = vmatprep.subr.mxu0 %v342
    %406 = vmatpush1.msra.mxu0 %v341
    %407 = vmatprep.subr.mxu0 %v344
    %408 = vmatpush1.msra.mxu0 %v343
    %409 = vmatprep.subr.mxu0 %v346
    %410 = vmatpush1.msra.mxu0 %v345
    %411 = vmatprep.subr.mxu0 %v348
    %412 = vmatpush1.msra.mxu0 %v347
    %413 = vmatprep.subr.mxu0 %v350
    %414 = vmatpush1.msra.mxu0 %v349
    %415 = vmatprep.subr.mxu0 %v352
    %416 = vmatpush1.msra.mxu0 %v351
    %417 = vmatprep.subr.mxu0 %v354
    %418 = vmatpush1.msra.mxu0 %v353
    %419 = vmatprep.subr.mxu0 %v356
    %420 = vmatpush1.msra.mxu0 %v355
    %421 = vmatprep.subr.mxu0 %v358
    %422 = vmatpush1.msra.mxu0 %v357
    %423 = vmatprep.subr.mxu0 %v360
    %424 = vmatpush1.msra.mxu0 %v359
    %425 = vmatprep.subr.mxu0 %v362
    %426 = vmatpush1.msra.mxu0 %v361
    %427 = vmatprep.subr.mxu0 %v364
    %428 = vmatpush1.msra.mxu0 %v363
    %429 = vmatprep.subr.mxu0 %v366
    %430 = vmatpush1.msra.mxu0 %v365
    %431 = vmatprep.subr.mxu0 %v368
    %432 = vmatpush1.msra.mxu0 %v367
    %433 = vmatprep.subr.mxu0 %v370
    %434 = vmatpush1.msra.mxu0 %v369
    %435 = vmatprep.subr.mxu0 %v372
    %436 = vmatpush1.msra.mxu0 %v371
    %437 = vmatprep.subr.mxu0 %v374
    %438 = vmatpush1.msra.mxu0 %v373
    %439 = vmatprep.subr.mxu0 %v376
    %440 = vmatpush1.msra.mxu0 %v375
    %441 = vmatprep.subr.mxu0 %v378
    %442 = vmatpush1.msra.mxu0 %v377
    %443 = vmatprep.subr.mxu0 %v380
    %444 = vmatpush1.msra.mxu0 %v379
    %445 = vmatprep.subr.mxu0 %v382
    %446 = vmatpush1.msra.mxu0 %v381
    %447 = vmatprep.subr.mxu0 %v384
    %448 = vmatpush1.msra.mxu0 %v383
    %449 = vmatprep.subr.mxu0 %v386
    %450 = vmatpush1.msra.mxu0 %v385
    %451 = vmatprep.subr.mxu0 %v388
    %452 = vmatpush1.msra.mxu0 %v387
    %453 = vmatprep.subr.mxu0 %v390
    %454 = vmatpush1.msra.mxu0 %v389
    %455 = vmatprep.subr.mxu0 %v392
    %456 = vmatpush1.msra.mxu0 %v391
    %457 = vmatprep.subr.mxu0 %v394
    %458 = vmatpush1.msra.mxu0 %v393
    %459 = vmatprep.subr.mxu0 %v396
    %460 = vmatpush1.msra.mxu0 %v395
    %461 = vmatprep.subr.mxu0 %v398
    %462 = vmatpush1.msra.mxu0 %v397
    %463 = vmatprep.subr.mxu0 %v400
    %464 = vmatpush1.msra.mxu0 %v399
    %465 = vmatprep.subr.mxu0 %v402
    %466 = vmatpush1.msra.mxu0 %v401
    %467 = vmatprep.mubr.f32.mxu0 %v310
    %468 = vmatmul.mubr.f32.gmra.mrb[0].mxu0 %v308
    %v469 = vpop.f32.mrb[0].mxu0
    %v470 = vadd.f32 0.0, %v469
    %v471 = vpop.f32.mrb[0].mxu0
    %v472 = vadd.f32 0.0, %v471
    %473 = vmatprep.mubr.f32.mxu0 %v314
    %474 = vmatmul.mubr.f32.gmra.mrb[0].mxu0 %v312
    %v475 = vpop.f32.mrb[0].mxu0
    %v476 = vadd.f32 0.0, %v475
    %v477 = vpop.f32.mrb[0].mxu0
    %v478 = vadd.f32 0.0, %v477
    %479 = vmatprep.mubr.f32.mxu0 %v318
    %480 = vmatmul.mubr.f32.gmra.mrb[0].mxu0 %v316
    %v481 = vpop.f32.mrb[0].mxu0
    %v482 = vadd.f32 0.0, %v481
    %v483 = vpop.f32.mrb[0].mxu0
    %v484 = vadd.f32 0.0, %v483
    %485 = vmatprep.mubr.f32.mxu0 %v322
    %486 = vmatmul.mubr.f32.gmra.mrb[0].mxu0 %v320
    %v487 = vpop.f32.mrb[0].mxu0
    %v488 = vadd.f32 0.0, %v487
    %v489 = vpop.f32.mrb[0].mxu0
    %v490 = vadd.f32 0.0, %v489
    %491 = vmatprep.mubr.f32.mxu0 %v326
    %492 = vmatmul.mubr.f32.gmra.mrb[0].mxu0 %v324
    %v493 = vpop.f32.mrb[0].mxu0
    %v494 = vadd.f32 0.0, %v493
    %v495 = vpop.f32.mrb[0].mxu0
    %v496 = vadd.f32 0.0, %v495
    %497 = vmatprep.mubr.f32.mxu0 %v330
    %498 = vmatmul.mubr.f32.gmra.mrb[0].mxu0 %v328
    %v499 = vpop.f32.mrb[0].mxu0
    %v500 = vadd.f32 0.0, %v499
    %v501 = vpop.f32.mrb[0].mxu0
    %v502 = vadd.f32 0.0, %v501
    %503 = vmatprep.mubr.f32.mxu0 %v334
    %504 = vmatmul.mubr.f32.gmra.mrb[0].mxu0 %v332
    %v505 = vpop.f32.mrb[0].mxu0
    %v506 = vadd.f32 0.0, %v505
    %v507 = vpop.f32.mrb[0].mxu0
    %v508 = vadd.f32 0.0, %v507
    %509 = vmatprep.mubr.f32.mxu0 %v338
    %510 = vmatmul.mubr.f32.gmra.mrb[0].mxu0 %v336
    %v511 = vpop.f32.mrb[0].mxu0
    %v512 = vadd.f32 0.0, %v511
    %v513 = vpop.f32.mrb[0].mxu0
    %v514 = vadd.f32 0.0, %v513
    %515 = vdwg.mxu0
    %v516 = vmax.f32 %v470, 1e-30
    %v517 = vmax.f32 %v472, 1e-30
    %v518 = vmax.f32 %v476, 1e-30
    %v519 = vmax.f32 %v478, 1e-30
    %v520 = vmax.f32 %v482, 1e-30
    %v521 = vmax.f32 %v484, 1e-30
    %v522 = vmax.f32 %v488, 1e-30
    %v523 = vmax.f32 %v490, 1e-30
    %v524 = vmax.f32 %v494, 1e-30
    %v525 = vmax.f32 %v496, 1e-30
    %v526 = vmax.f32 %v500, 1e-30
    %v527 = vmax.f32 %v502, 1e-30
    %v528 = vmax.f32 %v506, 1e-30
    %v529 = vmax.f32 %v508, 1e-30
    %v530 = vmax.f32 %v512, 1e-30
    %v531 = vmax.f32 %v514, 1e-30
    %v532 = vrcp.pop %v516
    %v533 = vrcp.pop %v517
    %v534 = vrcp.pop %v518
    %v535 = vrcp.pop %v519
    %v536 = vrcp.pop %v520
    %v537 = vrcp.pop %v521
    %v538 = vrcp.pop %v522
    %v539 = vrcp.pop %v523
    %v540 = vrcp.pop %v524
    %v541 = vrcp.pop %v525
    %v542 = vrcp.pop %v526
    %v543 = vrcp.pop %v527
    %v544 = vrcp.pop %v528
    %v545 = vrcp.pop %v529
    %v546 = vrcp.pop %v530
    %v547 = vrcp.pop %v531
    %v548 = vmul.f32 %v516, %v532
    %v549 = vmul.f32 %v517, %v533
    %v550 = vmul.f32 %v518, %v534
    %v551 = vmul.f32 %v519, %v535
    %v552 = vmul.f32 %v520, %v536
    %v553 = vmul.f32 %v521, %v537
    %v554 = vmul.f32 %v522, %v538
    %v555 = vmul.f32 %v523, %v539
    %v556 = vmul.f32 %v524, %v540
    %v557 = vmul.f32 %v525, %v541
    %v558 = vmul.f32 %v526, %v542
    %v559 = vmul.f32 %v527, %v543
    %v560 = vmul.f32 %v528, %v544
    %v561 = vmul.f32 %v529, %v545
    %v562 = vmul.f32 %v530, %v546
    %v563 = vmul.f32 %v531, %v547
    %v564 = vsub.f32 2.0, %v548
    %v565 = vsub.f32 2.0, %v549
    %v566 = vsub.f32 2.0, %v550
    %v567 = vsub.f32 2.0, %v551
    %v568 = vsub.f32 2.0, %v552
    %v569 = vsub.f32 2.0, %v553
    %v570 = vsub.f32 2.0, %v554
    %v571 = vsub.f32 2.0, %v555
    %v572 = vsub.f32 2.0, %v556
    %v573 = vsub.f32 2.0, %v557
    %v574 = vsub.f32 2.0, %v558
    %v575 = vsub.f32 2.0, %v559
    %v576 = vsub.f32 2.0, %v560
    %v577 = vsub.f32 2.0, %v561
    %v578 = vsub.f32 2.0, %v562
    %v579 = vsub.f32 2.0, %v563
    %v580 = vmul.f32 %v532, %v564
    %v581 = vmul.f32 %v533, %v565
    %v582 = vmul.f32 %v534, %v566
    %v583 = vmul.f32 %v535, %v567
    %v584 = vmul.f32 %v536, %v568
    %v585 = vmul.f32 %v537, %v569
    %v586 = vmul.f32 %v538, %v570
    %v587 = vmul.f32 %v539, %v571
    %v588 = vmul.f32 %v540, %v572
    %v589 = vmul.f32 %v541, %v573
    %v590 = vmul.f32 %v542, %v574
    %v591 = vmul.f32 %v543, %v575
    %v592 = vmul.f32 %v544, %v576
    %v593 = vmul.f32 %v545, %v577
    %v594 = vmul.f32 %v546, %v578
    %v595 = vmul.f32 %v547, %v579
    %v596 = vmul.f32 %v308, %v580
    %v597 = vmul.f32 %v310, %v581
    %v598 = vmul.f32 %v312, %v582
    %v599 = vmul.f32 %v314, %v583
    %v600 = vmul.f32 %v316, %v584
    %v601 = vmul.f32 %v318, %v585
    %v602 = vmul.f32 %v320, %v586
    %v603 = vmul.f32 %v322, %v587
    %v604 = vmul.f32 %v324, %v588
    %v605 = vmul.f32 %v326, %v589
    %v606 = vmul.f32 %v328, %v590
    %v607 = vmul.f32 %v330, %v591
    %v608 = vmul.f32 %v332, %v592
    %v609 = vmul.f32 %v334, %v593
    %v610 = vmul.f32 %v336, %v594
    %v611 = vmul.f32 %v338, %v595
    %v612 = vld [vmem:[%s4] sm:$0xff]
    %v613 = vmul.f32 %v596, %v62
    %v614 = vmul.f32 %v597, %v63
    %v615 = vmul.f32 %v598, %v64
    %v616 = vmul.f32 %v599, %v65
    %v617 = vmul.f32 %v600, %v66
    %v618 = vmul.f32 %v601, %v67
    %v619 = vmul.f32 %v602, %v68
    %v620 = vmul.f32 %v603, %v69
    %v621 = vmul.f32 %v604, %v70
    %v622 = vmul.f32 %v605, %v71
    %v623 = vmul.f32 %v606, %v72
    %v624 = vmul.f32 %v607, %v73
    %v625 = vmul.f32 %v608, %v74
    %v626 = vmul.f32 %v609, %v75
    %v627 = vmul.f32 %v610, %v76
    %v628 = vmul.f32 %v611, %v77
    %vm629 = vcmask 523264
    %v631 = vsel %vm629, %v612, 0
    %633 = vmatprep.subr.mxu0 %v614
    %634 = vmatpush1.msra.mxu0 %v613
    %635 = vmatprep.subr.mxu0 %v616
    %636 = vmatpush1.msra.mxu0 %v615
    %637 = vmatprep.subr.mxu0 %v618
    %638 = vmatpush1.msra.mxu0 %v617
    %639 = vmatprep.subr.mxu0 %v620
    %640 = vmatpush1.msra.mxu0 %v619
    %641 = vmatprep.subr.mxu0 %v622
    %642 = vmatpush1.msra.mxu0 %v621
    %643 = vmatprep.subr.mxu0 %v624
    %644 = vmatpush1.msra.mxu0 %v623
    %645 = vmatprep.subr.mxu0 %v626
    %646 = vmatpush1.msra.mxu0 %v625
    %647 = vmatprep.subr.mxu0 %v628
    %648 = vmatpush1.msra.mxu0 %v627
    %649 = vmatprep.subr.mxu0 0.0
    %650 = vmatpush1.msra.mxu0 0.0
    %651 = vmatprep.subr.mxu0 0.0
    %652 = vmatpush1.msra.mxu0 0.0
    %653 = vmatprep.subr.mxu0 0.0
    %654 = vmatpush1.msra.mxu0 0.0
    %655 = vmatprep.subr.mxu0 0.0
    %656 = vmatpush1.msra.mxu0 0.0
    %657 = vmatprep.subr.mxu0 0.0
    %658 = vmatpush1.msra.mxu0 0.0
    %659 = vmatprep.subr.mxu0 0.0
    %660 = vmatpush1.msra.mxu0 0.0
    %661 = vmatprep.subr.mxu0 0.0
    %662 = vmatpush1.msra.mxu0 0.0
    %663 = vmatprep.subr.mxu0 0.0
    %664 = vmatpush1.msra.mxu0 0.0
    %665 = vmatprep.subr.mxu0 0.0
    %666 = vmatpush1.msra.mxu0 0.0
    %667 = vmatprep.subr.mxu0 0.0
    %668 = vmatpush1.msra.mxu0 0.0
    %669 = vmatprep.subr.mxu0 0.0
    %670 = vmatpush1.msra.mxu0 0.0
    %671 = vmatprep.subr.mxu0 0.0
    %672 = vmatpush1.msra.mxu0 0.0
    %673 = vmatprep.subr.mxu0 0.0
    %674 = vmatpush1.msra.mxu0 0.0
    %675 = vmatprep.subr.mxu0 0.0
    %676 = vmatpush1.msra.mxu0 0.0
    %677 = vmatprep.subr.mxu0 0.0
    %678 = vmatpush1.msra.mxu0 0.0
    %679 = vmatprep.subr.mxu0 0.0
    %680 = vmatpush1.msra.mxu0 0.0
    %681 = vmatprep.subr.mxu0 0.0
    %682 = vmatpush1.msra.mxu0 0.0
    %683 = vmatprep.subr.mxu0 0.0
    %684 = vmatpush1.msra.mxu0 0.0
    %685 = vmatprep.subr.mxu0 0.0
    %686 = vmatpush1.msra.mxu0 0.0
    %687 = vmatprep.subr.mxu0 0.0
    %688 = vmatpush1.msra.mxu0 0.0
    %689 = vmatprep.subr.mxu0 0.0
    %690 = vmatpush1.msra.mxu0 0.0
    %691 = vmatprep.subr.mxu0 0.0
    %692 = vmatpush1.msra.mxu0 0.0
    %693 = vmatprep.subr.mxu0 0.0
    %694 = vmatpush1.msra.mxu0 0.0
    %695 = vmatprep.subr.mxu0 0.0
    %696 = vmatpush1.msra.mxu0 0.0
    %697 = vmatprep.mubr.f32.mxu0 0.0
    %698 = vmatmul.mubr.f32.gmra.mrb[0].mxu0 %v631
    %v699 = vpop.f32.mrb[0].mxu0
    %v700 = vadd.f32 0.0, %v699
    %v701 = vpop.f32.mrb[0].mxu0
    %v702 = vadd.f32 0.0, %v701
    %703 = vdwg.mxu0
    %704 = vst [vmem:[#allocation8] sm:$0xff] %v700
    %705 = vst [vmem:[#allocation8 + $0x8] sm:$0xff] %v702
    // Predicated region
    $region34: #{tpu_custom_call.1} parent=1 // pred_check
      _
    $region35: #{tpu_custom_call.1} parent=1 // pred_check_branch
      %707 = sbr.rel (0) target = $region37
    $region36: #{tpu_custom_call.1} parent=1 // pred_region
      %s709 = ssub.s32 256, 256
      %710 = vsyncadd [#allocation4], %s709
      %s712 = sshll.u32 [#allocation8], 4
      %s713 = int_to_ptr.vmem [resolvable:$true] %s712
      %715 = dma.vmem_to_hbm [thread:$0]  %s713, 256, %s5, [#allocation4]
    $region37: #{tpu_custom_call.1} parent=1 // pred_fallthru
      _
    // Predicated region
    $region38: #{tpu_custom_call.1} parent=1 // pred_check
      _
    $region39: #{tpu_custom_call.1} parent=1 // pred_check_branch
      %717 = sbr.rel (0) target = $region41
    $region40: #{tpu_custom_call.1} parent=1 // pred_region
      %718 = dma.done [#allocation4], 256
    $region41: #{tpu_custom_call.1} parent=1 // pred_fallthru
      _
    %719 = vsyncpa [#allocation3], 1
    %720 = vsyncpa [#allocation6], 1
    %721 = vsyncpa [#allocation4], 1

</llo_original>
